<compile_context>
chip_gen: v7x
topology: tpu7x:2x2x1
jax: 0.10.0
libtpu: 0.0.40
codegen_flags: <defaults>
</compile_context>

<pallas_src>
import jax
import jax.numpy as jnp
from jax.experimental import pallas as pl
from jax.experimental.pallas import tpu as pltpu

IN_DIM = 256
HID_DIM = 128
CLASS_NUM = 7          # dataset == 'NW'
OUT_PAD = 128          # lane-dense padded fc3 output width
DROP_P = 0.5
BN_EPS = 1e-5

# keep element iff bits >= threshold  ->  P(keep) = 1 - DROP_P  (exact for 0.5)
_DROP_THRESHOLD = int(DROP_P * (1 << 32))      # 2**31 for p = 0.5
_KEEP_SCALE = 1.0 / (1.0 - DROP_P)


def predictor_kernel(x_ref, bits_ref, w2_ref, b2_ref, w3_ref, b3_ref, out_ref):
    # fc2 (+ folded BatchNorm affine): (TB, 256) @ (256, 128) + (1, 128)
    y = jnp.dot(x_ref[...], w2_ref[...],
                preferred_element_type=jnp.float32) + b2_ref[...]

    # ReLU
    y = jnp.maximum(y, 0.0)

    # dropout(p=0.5), training semantics: single integer compare on raw bits,
    # scale survivors by 1/(1-p).
    keep = bits_ref[...] >= jnp.uint32(_DROP_THRESHOLD)
    y = jnp.where(keep, y * jnp.float32(_KEEP_SCALE), jnp.float32(0.0))

    # fc3, lane-padded: (TB, 128) @ (128, 128) + (1, 128).
    # Columns >= CLASS_NUM are zero-weight/zero-bias; wrapper slices them off.
    out_ref[...] = jnp.dot(y, w3_ref[...],
                           preferred_element_type=jnp.float32) + b3_ref[...]


def _pick_tile_b(B):
    """Largest power-of-two tile (<=1024, multiple of 8) dividing B, else B."""
    for t in (1024, 512, 256, 128, 64, 32, 16, 8):
        if B % t == 0:
            return t
    return B        # odd batch: one block equal to the full batch dimension


def predictor_forward(x, params, key):
    """x: (B, 256) float32 -> (B, CLASS_NUM) float32."""
    B = x.shape[0]
    w2f, b2f, w3p, b3p = params

    # Per-element dropout bits, generated XLA-side (portable: TPU + interpret).
    bits = jax.random.bits(key, (B, HID_DIM), dtype=jnp.uint32)

    tb = _pick_tile_b(B)
    grid = (B // tb,)

    def row_spec(width):
        return pl.BlockSpec((tb, width), lambda i: (i, 0))

    def const_spec(shape):
        return pl.BlockSpec(shape, lambda i: (0, 0))

    out_padded = pl.pallas_call(
        predictor_kernel,
        out_shape=jax.ShapeDtypeStruct((B, OUT_PAD), jnp.float32),
        grid=grid,
        in_specs=[
            row_spec(IN_DIM),                 # x tile
            row_spec(HID_DIM),                # dropout bits tile
            const_spec((IN_DIM, HID_DIM)),    # fc2 weight (BN folded), resident
            const_spec((1, HID_DIM)),         # fc2 bias  (BN folded), resident
            const_spec((HID_DIM, OUT_PAD)),   # fc3 weight, lane-padded, resident
            const_spec((1, OUT_PAD)),         # fc3 bias,   lane-padded, resident
        ],
        out_specs=row_spec(OUT_PAD),
        compiler_params=pltpu.CompilerParams(
            dimension_semantics=("parallel",)),
    )(x, bits, w2f, b2f, w3p, b3p)

    return out_padded[:, :CLASS_NUM]


def init_params(key):
    """Synthetic parameters matching the PyTorch module shapes/initializers."""
    k_w2, k_b2, k_w3, k_b3 = jax.random.split(key, 4)
    # PyTorch nn.Linear stores (out, in); we keep the transposed (in, out)
    # layout so the kernel does plain row-major MXU matmuls.
    lim2 = 1.0 / jnp.sqrt(IN_DIM)
    w2t = jax.random.uniform(k_w2, (IN_DIM, HID_DIM), jnp.float32, -lim2, lim2)
    b2 = jax.random.uniform(k_b2, (HID_DIM,), jnp.float32, -lim2, lim2)

    lim3 = 1.0 / jnp.sqrt(HID_DIM)
    w3t = jax.random.uniform(k_w3, (HID_DIM, CLASS_NUM), jnp.float32, -lim3, lim3)
    b3 = jax.random.uniform(k_b3, (CLASS_NUM,), jnp.float32, -lim3, lim3)

    # BatchNorm1d(128) defaults: gamma=1, beta=0, running_mean=0, running_var=1
    gamma = jnp.ones((HID_DIM,), jnp.float32)
    beta = jnp.zeros((HID_DIM,), jnp.float32)
    running_mean = jnp.zeros((HID_DIM,), jnp.float32)
    running_var = jnp.ones((HID_DIM,), jnp.float32)

    return dict(w2t=w2t, b2=b2, w3t=w3t, b3=b3, gamma=gamma, beta=beta,
                mean=running_mean, var=running_var)


def pack_params(p):
    """Fold eval-mode BatchNorm into fc2 and lane-pad fc3 for the kernel."""
    bn_scale = p["gamma"] / jnp.sqrt(p["var"] + BN_EPS)           # (128,)
    bn_bias = p["beta"] - p["mean"] * bn_scale                    # (128,)

    w2_fold = p["w2t"] * bn_scale[None, :]                        # (256, 128)
    b2_fold = (p["b2"] * bn_scale + bn_bias).reshape(1, HID_DIM)  # (1, 128)

    w3_pad = jnp.zeros((HID_DIM, OUT_PAD), jnp.float32)
    w3_pad = w3_pad.at[:, :CLASS_NUM].set(p["w3t"])               # (128, 128)
    b3_pad = jnp.zeros((1, OUT_PAD), jnp.float32)
    b3_pad = b3_pad.at[0, :CLASS_NUM].set(p["b3"])                # (1, 128)

    return w2_fold, b2_fold, w3_pad, b3_pad


if __name__ == "__main__":
    key = jax.random.PRNGKey(0)
    k_params, k_x, k_drop = jax.random.split(key, 3)

    raw_params = init_params(k_params)
    params = pack_params(raw_params)

    B = 8
    x = jax.random.normal(k_x, (B, IN_DIM), jnp.float32)

    out = predictor_forward(x, params, k_drop)
    out = jax.block_until_ready(out)

    assert out.shape == (B, CLASS_NUM), out.shape
    assert out.dtype == jnp.float32, out.dtype
    assert bool(jnp.all(jnp.isfinite(out)))

    print("KERNEL_OK")
</pallas_src>

<mosaic_0001>
module attributes {stable_mosaic.version = 11 : i64} {
  func.func @predictor_kernel(%arg0: i32, %arg1: memref<8x256xf32, #tpu.memory_space<vmem>>, %arg2: memref<8x128xi32, #tpu.memory_space<vmem>>, %arg3: memref<256x128xf32, #tpu.memory_space<vmem>>, %arg4: memref<1x128xf32, #tpu.memory_space<vmem>>, %arg5: memref<128x128xf32, #tpu.memory_space<vmem>>, %arg6: memref<1x128xf32, #tpu.memory_space<vmem>>, %arg7: memref<8x128xf32, #tpu.memory_space<vmem>>) attributes {dimension_semantics = [#tpu.dimension_semantics<parallel>], iteration_bounds = array<i64: 1>, scalar_prefetch = 0 : i64, scratch_operands = 0 : i64, tpu.core_type = #tpu.core_type<tc>, window_params = [{transform_indices = @transform_0, window_bounds = array<i64: 8, 256>}, {transform_indices = @transform_1, window_bounds = array<i64: 8, 128>}, {pipeline_mode = #tpu.pipeline_mode<synchronous>, transform_indices = @transform_2, window_bounds = array<i64: 256, 128>}, {pipeline_mode = #tpu.pipeline_mode<synchronous>, transform_indices = @transform_3, window_bounds = array<i64: 1, 128>}, {pipeline_mode = #tpu.pipeline_mode<synchronous>, transform_indices = @transform_4, window_bounds = array<i64: 128, 128>}, {pipeline_mode = #tpu.pipeline_mode<synchronous>, transform_indices = @transform_5, window_bounds = array<i64: 1, 128>}, {transform_indices = @transform_6, window_bounds = array<i64: 8, 128>}]} {
    %c0 = arith.constant 0 : index
    %c0_0 = arith.constant 0 : index
    %0 = vector.load %arg1[%c0, %c0_0] : memref<8x256xf32, #tpu.memory_space<vmem>>, vector<8x256xf32>
    %c0_1 = arith.constant 0 : index
    %c0_2 = arith.constant 0 : index
    %1 = vector.load %arg3[%c0_1, %c0_2] : memref<256x128xf32, #tpu.memory_space<vmem>>, vector<256x128xf32>
    %cst = arith.constant dense<0.000000e+00> : vector<8x128xf32>
    %2 = tpu.matmul %0, %1, %cst {dimension_numbers = #tpu.dot_dimension_numbers<[1], [0], [0], [1], [0, 0, 1, 1], [], []>} : vector<8x256xf32>, vector<256x128xf32>, vector<8x128xf32> -> vector<8x128xf32>
    %c0_3 = arith.constant 0 : index
    %c0_4 = arith.constant 0 : index
    %3 = vector.load %arg4[%c0_3, %c0_4] : memref<1x128xf32, #tpu.memory_space<vmem>>, vector<1x128xf32>
    %4 = vector.broadcast %3 : vector<1x128xf32> to vector<8x128xf32>
    %5 = arith.addf %2, %4 : vector<8x128xf32>
    %cst_5 = arith.constant 0.000000e+00 : f32
    %6 = vector.broadcast %cst_5 : f32 to vector<8x128xf32>
    %7 = arith.maximumf %5, %6 : vector<8x128xf32>
    %c0_6 = arith.constant 0 : index
    %c0_7 = arith.constant 0 : index
    %8 = vector.load %arg2[%c0_6, %c0_7] : memref<8x128xi32, #tpu.memory_space<vmem>>, vector<8x128xi32>
    %c-2147483648_i32 = arith.constant -2147483648 : i32
    %9 = vector.broadcast %c-2147483648_i32 : i32 to vector<8x128xi32>
    %10 = arith.cmpi uge, %8, %9 : vector<8x128xi32>
    %cst_8 = arith.constant 2.000000e+00 : f32
    %11 = vector.broadcast %cst_8 : f32 to vector<8x128xf32>
    %12 = arith.mulf %7, %11 : vector<8x128xf32>
    %cst_9 = arith.constant 0.000000e+00 : f32
    %13 = vector.broadcast %cst_9 : f32 to vector<8x128xf32>
    %14 = arith.select %10, %12, %13 : vector<8x128xi1>, vector<8x128xf32>
    %c0_10 = arith.constant 0 : index
    %c0_11 = arith.constant 0 : index
    %15 = vector.load %arg5[%c0_10, %c0_11] : memref<128x128xf32, #tpu.memory_space<vmem>>, vector<128x128xf32>
    %cst_12 = arith.constant dense<0.000000e+00> : vector<8x128xf32>
    %16 = tpu.matmul %14, %15, %cst_12 {dimension_numbers = #tpu.dot_dimension_numbers<[1], [0], [0], [1], [0, 0, 1, 1], [], []>} : vector<8x128xf32>, vector<128x128xf32>, vector<8x128xf32> -> vector<8x128xf32>
    %c0_13 = arith.constant 0 : index
    %c0_14 = arith.constant 0 : index
    %17 = vector.load %arg6[%c0_13, %c0_14] : memref<1x128xf32, #tpu.memory_space<vmem>>, vector<1x128xf32>
    %18 = vector.broadcast %17 : vector<1x128xf32> to vector<8x128xf32>
    %19 = arith.addf %16, %18 : vector<8x128xf32>
    %c0_15 = arith.constant 0 : index
    %c0_16 = arith.constant 0 : index
    %20 = vector.load %arg7[%c0_15, %c0_16] : memref<8x128xf32, #tpu.memory_space<vmem>>, vector<8x128xf32>
    tpu.vector_store %arg7[%c0_15, %c0_16], %19 {strides = array<i32>} : memref<8x128xf32, #tpu.memory_space<vmem>>, vector<8x128xf32>,
    return
  }
  func.func @transform_0(%arg0: i32) -> (i32, i32) {
    %c0_i32 = arith.constant 0 : i32
    %c0_i32_0 = arith.constant 0 : i32
    return %arg0, %c0_i32 : i32, i32
  }
  func.func @transform_1(%arg0: i32) -> (i32, i32) {
    %c0_i32 = arith.constant 0 : i32
    %c0_i32_0 = arith.constant 0 : i32
    return %arg0, %c0_i32 : i32, i32
  }
  func.func @transform_2(%arg0: i32) -> (i32, i32) {
    %c0_i32 = arith.constant 0 : i32
    %c0_i32_0 = arith.constant 0 : i32
    %c0_i32_1 = arith.constant 0 : i32
    return %c0_i32, %c0_i32_0 : i32, i32
  }
  func.func @transform_3(%arg0: i32) -> (i32, i32) {
    %c0_i32 = arith.constant 0 : i32
    %c0_i32_0 = arith.constant 0 : i32
    %c0_i32_1 = arith.constant 0 : i32
    return %c0_i32, %c0_i32_0 : i32, i32
  }
  func.func @transform_4(%arg0: i32) -> (i32, i32) {
    %c0_i32 = arith.constant 0 : i32
    %c0_i32_0 = arith.constant 0 : i32
    %c0_i32_1 = arith.constant 0 : i32
    return %c0_i32, %c0_i32_0 : i32, i32
  }
  func.func @transform_5(%arg0: i32) -> (i32, i32) {
    %c0_i32 = arith.constant 0 : i32
    %c0_i32_0 = arith.constant 0 : i32
    %c0_i32_1 = arith.constant 0 : i32
    return %c0_i32, %c0_i32_0 : i32, i32
  }
  func.func @transform_6(%arg0: i32) -> (i32, i32) {
    %c0_i32 = arith.constant 0 : i32
    %c0_i32_0 = arith.constant 0 : i32
    return %arg0, %c0_i32 : i32, i32
  }
}

</mosaic_0001>

<llo_original>
// kernel: tpu_custom_call.1
$region0: #{tpu_custom_call.1}
  #allocation0 [shape = 'u32[]', space=smem, size = 0x4, offset = 0x4, fixed_abs, tag = 'smem constant byte address 0x4 - core index']
  #allocation1 [shape = 'u32[144,128]{1,0:T(1,128)}', space=vmem, size = 0x12000, scoped, tag = 'internal scratch']
  %s0 = inlined_call_operand.hbm [shape: f32[8,256], index: 0, kind: input, shape index: {}]
  %s1 = inlined_call_operand.hbm [shape: u32[8,128], index: 1, kind: input, shape index: {}]
  %s2 = inlined_call_operand.hbm [shape: f32[256,128], index: 2, kind: input, shape index: {}]
  %s3 = inlined_call_operand.vmem [shape: f32[1,128], index: 3, kind: input, shape index: {}]
  %s4 = inlined_call_operand.hbm [shape: f32[128,128], index: 4, kind: input, shape index: {}]
  %s5 = inlined_call_operand.vmem [shape: f32[1,128], index: 5, kind: input, shape index: {}]
  %s6 = inlined_call_operand.hbm [shape: f32[8,128], index: 6, kind: output, shape index: {}]
  %s7 = sld [smem:[#allocation0]]
  $region50: #{tpu_custom_call.1} parent=0
    _
  %s9 = ssub.s32 1, %s7
  %s10 = scalar_select 0, %s9, %s7
  $region1: #{tpu_custom_call.1} parent=0
    #allocation2 [shape = 'u8[8192]{0}', space=vmem, size = 0x2000, scoped, tag = 'input window, operand 0, single buffered']
    #allocation3 [shape = 's32[1]{0}', space=sflag, size = 0x4, scoped, tag = 'scoped memory for tpu_custom_call.1']
    #allocation4 [shape = 's32[1]{0}', space=sflag, size = 0x4, scoped, tag = 'scoped memory for tpu_custom_call.1']
    #allocation5 [shape = 'u8[4096]{0}', space=vmem, size = 0x1000, scoped, tag = 'input window, operand 1, single buffered']
    #allocation6 [shape = 's32[1]{0}', space=sflag, size = 0x4, scoped, tag = 'scoped memory for tpu_custom_call.1']
    #allocation7 [shape = 'u8[131072]{0}', space=vmem, size = 0x20000, scoped, tag = 'input window, operand 2, single buffered']
    #allocation8 [shape = 'u8[65536]{0}', space=vmem, size = 0x10000, scoped, tag = 'input window, operand 4, single buffered']
    #allocation9 [shape = 's32[1]{0}', space=sflag, size = 0x4, scoped, tag = 'scoped memory for tpu_custom_call.1']
    #allocation10 [shape = 'u8[4096]{0}', space=vmem, size = 0x1000, scoped, tag = 'output window, operand 0, single buffered']
    %11 = vsyncpa [#allocation3], 0
    %12 = vsyncpa [#allocation6], 0
    %13 = vsyncpa [#allocation9], 0
    %14 = vsyncpa [#allocation4], 0
    // Predicated region
    $region2: #{tpu_custom_call.1} parent=1 // pred_check
      _
    $region3: #{tpu_custom_call.1} parent=1 // pred_check_branch
      %16 = sbr.rel (0) target = $region5
    $region4: #{tpu_custom_call.1} parent=1 // pred_region
      %s18 = ssub.s32 256, 256
      %19 = vsyncadd [#allocation3], %s18
      %s21 = sshll.u32 [#allocation2], 4
      %s22 = int_to_ptr.vmem [resolvable:$true] %s21
      %24 = dma.hbm_to_vmem [thread:$0]  %s0, 256, %s22, [#allocation3]
    $region5: #{tpu_custom_call.1} parent=1 // pred_fallthru
      _
    // Predicated region
    $region6: #{tpu_custom_call.1} parent=1 // pred_check
      _
    $region7: #{tpu_custom_call.1} parent=1 // pred_check_branch
      %26 = sbr.rel (0) target = $region9
    $region8: #{tpu_custom_call.1} parent=1 // pred_region
      %s28 = ssub.s32 128, 128
      %29 = vsyncadd [#allocation6], %s28
      %s31 = sshll.u32 [#allocation5], 4
      %s32 = int_to_ptr.vmem [resolvable:$true] %s31
      %34 = dma.hbm_to_vmem [thread:$0]  %s1, 128, %s32, [#allocation6]
    $region9: #{tpu_custom_call.1} parent=1 // pred_fallthru
      _
    // Predicated region
    $region10: #{tpu_custom_call.1} parent=1 // pred_check
      _
    $region11: #{tpu_custom_call.1} parent=1 // pred_check_branch
      %36 = sbr.rel (0) target = $region13
    $region12: #{tpu_custom_call.1} parent=1 // pred_region
      %s38 = ssub.s32 4096, 4096
      %39 = vsyncadd [#allocation6], %s38
      %s40 = sshll.u32 [#allocation7], 4
      %s41 = int_to_ptr.vmem [resolvable:$true] %s40
      %46 = dma.hbm_to_vmem [thread:$0]  %s2, 4096, %s41, [#allocation6], 128, 128, 8
    $region13: #{tpu_custom_call.1} parent=1 // pred_fallthru
      _
    // Predicated region
    $region14: #{tpu_custom_call.1} parent=1 // pred_check
      _
    $region15: #{tpu_custom_call.1} parent=1 // pred_check_branch
      %48 = sbr.rel (0) target = $region17
    $region16: #{tpu_custom_call.1} parent=1 // pred_region
      _
    $region17: #{tpu_custom_call.1} parent=1 // pred_fallthru
      _
    // Predicated region
    $region18: #{tpu_custom_call.1} parent=1 // pred_check
      _
    $region19: #{tpu_custom_call.1} parent=1 // pred_check_branch
      %50 = sbr.rel (0) target = $region21
    $region20: #{tpu_custom_call.1} parent=1 // pred_region
      %s52 = ssub.s32 2048, 2048
      %53 = vsyncadd [#allocation9], %s52
      %s54 = sshll.u32 [#allocation8], 4
      %s55 = int_to_ptr.vmem [resolvable:$true] %s54
      %60 = dma.hbm_to_vmem [thread:$0]  %s4, 2048, %s55, [#allocation9], 128, 128, 8
    $region21: #{tpu_custom_call.1} parent=1 // pred_fallthru
      _
    // Predicated region
    $region22: #{tpu_custom_call.1} parent=1 // pred_check
      _
    $region23: #{tpu_custom_call.1} parent=1 // pred_check_branch
      %62 = sbr.rel (0) target = $region25
    $region24: #{tpu_custom_call.1} parent=1 // pred_region
      _
    $region25: #{tpu_custom_call.1} parent=1 // pred_fallthru
      _
    // Predicated region
    $region26: #{tpu_custom_call.1} parent=1 // pred_check
      _
    $region27: #{tpu_custom_call.1} parent=1 // pred_check_branch
      %64 = sbr.rel (0) target = $region29
    $region28: #{tpu_custom_call.1} parent=1 // pred_region
      %65 = dma.done [#allocation3], 256
    $region29: #{tpu_custom_call.1} parent=1 // pred_fallthru
      _
    // Predicated region
    $region30: #{tpu_custom_call.1} parent=1 // pred_check
      _
    $region31: #{tpu_custom_call.1} parent=1 // pred_check_branch
      %67 = sbr.rel (0) target = $region33
    $region32: #{tpu_custom_call.1} parent=1 // pred_region
      %68 = dma.done [#allocation6], 128
    $region33: #{tpu_custom_call.1} parent=1 // pred_fallthru
      _
    // Predicated region
    $region34: #{tpu_custom_call.1} parent=1 // pred_check
      _
    $region35: #{tpu_custom_call.1} parent=1 // pred_check_branch
      %70 = sbr.rel (0) target = $region37
    $region36: #{tpu_custom_call.1} parent=1 // pred_region
      %71 = dma.done [#allocation6], 4096
    $region37: #{tpu_custom_call.1} parent=1 // pred_fallthru
      _
    // Predicated region
    $region38: #{tpu_custom_call.1} parent=1 // pred_check
      _
    $region39: #{tpu_custom_call.1} parent=1 // pred_check_branch
      %73 = sbr.rel (0) target = $region41
    $region40: #{tpu_custom_call.1} parent=1 // pred_region
      %74 = dma.done [#allocation9], 2048
    $region41: #{tpu_custom_call.1} parent=1 // pred_fallthru
      _
    %v75 = vld [vmem:[#allocation2] sm:$0xff]
    %v76 = vld [vmem:[#allocation2 + $0x8] sm:$0xff]
    %v77 = vld [vmem:[#allocation7] sm:$0xff]
    %v78 = vld [vmem:[#allocation7 + $0x8] sm:$0xff]
    %v79 = vld [vmem:[#allocation7 + $0x10] sm:$0xff]
    %v80 = vld [vmem:[#allocation7 + $0x18] sm:$0xff]
    %v81 = vld [vmem:[#allocation7 + $0x20] sm:$0xff]
    %v82 = vld [vmem:[#allocation7 + $0x28] sm:$0xff]
    %v83 = vld [vmem:[#allocation7 + $0x30] sm:$0xff]
    %v84 = vld [vmem:[#allocation7 + $0x38] sm:$0xff]
    %v85 = vld [vmem:[#allocation7 + $0x40] sm:$0xff]
    %v86 = vld [vmem:[#allocation7 + $0x48] sm:$0xff]
    %v87 = vld [vmem:[#allocation7 + $0x50] sm:$0xff]
    %v88 = vld [vmem:[#allocation7 + $0x58] sm:$0xff]
    %v89 = vld [vmem:[#allocation7 + $0x60] sm:$0xff]
    %v90 = vld [vmem:[#allocation7 + $0x68] sm:$0xff]
    %v91 = vld [vmem:[#allocation7 + $0x70] sm:$0xff]
    %v92 = vld [vmem:[#allocation7 + $0x78] sm:$0xff]
    %v93 = vld [vmem:[#allocation7 + $0x80] sm:$0xff]
    %v94 = vld [vmem:[#allocation7 + $0x88] sm:$0xff]
    %v95 = vld [vmem:[#allocation7 + $0x90] sm:$0xff]
    %v96 = vld [vmem:[#allocation7 + $0x98] sm:$0xff]
    %v97 = vld [vmem:[#allocation7 + $0xa0] sm:$0xff]
    %v98 = vld [vmem:[#allocation7 + $0xa8] sm:$0xff]
    %v99 = vld [vmem:[#allocation7 + $0xb0] sm:$0xff]
    %v100 = vld [vmem:[#allocation7 + $0xb8] sm:$0xff]
    %v101 = vld [vmem:[#allocation7 + $0xc0] sm:$0xff]
    %v102 = vld [vmem:[#allocation7 + $0xc8] sm:$0xff]
    %v103 = vld [vmem:[#allocation7 + $0xd0] sm:$0xff]
    %v104 = vld [vmem:[#allocation7 + $0xd8] sm:$0xff]
    %v105 = vld [vmem:[#allocation7 + $0xe0] sm:$0xff]
    %v106 = vld [vmem:[#allocation7 + $0xe8] sm:$0xff]
    %v107 = vld [vmem:[#allocation7 + $0xf0] sm:$0xff]
    %v108 = vld [vmem:[#allocation7 + $0xf8] sm:$0xff]
    %v109 = vld [vmem:[%s3] sm:$0x1]
    %v111 = vlaneseq
    %v112 = vshrl.u32 %v111, 7
    %v113 = vsub.s32 0, %v112
    %v114 = vrot.slane %v109, %v113
    %116 = vmatprep.subr.mxu0 0.0
    %117 = vmatpush1.msra.mxu0 %v77
    %118 = vmatprep.subr.mxu0 0.0
    %119 = vmatpush1.msra.mxu0 %v78
    %120 = vmatprep.subr.mxu0 0.0
    %121 = vmatpush1.msra.mxu0 %v79
    %122 = vmatprep.subr.mxu0 0.0
    %123 = vmatpush1.msra.mxu0 %v80
    %124 = vmatprep.subr.mxu0 0.0
    %125 = vmatpush1.msra.mxu0 %v81
    %126 = vmatprep.subr.mxu0 0.0
    %127 = vmatpush1.msra.mxu0 %v82
    %128 = vmatprep.subr.mxu0 0.0
    %129 = vmatpush1.msra.mxu0 %v83
    %130 = vmatprep.subr.mxu0 0.0
    %131 = vmatpush1.msra.mxu0 %v84
    %132 = vmatprep.subr.mxu0 0.0
    %133 = vmatpush1.msra.mxu0 %v85
    %134 = vmatprep.subr.mxu0 0.0
    %135 = vmatpush1.msra.mxu0 %v86
    %136 = vmatprep.subr.mxu0 0.0
    %137 = vmatpush1.msra.mxu0 %v87
    %138 = vmatprep.subr.mxu0 0.0
    %139 = vmatpush1.msra.mxu0 %v88
    %140 = vmatprep.subr.mxu0 0.0
    %141 = vmatpush1.msra.mxu0 %v89
    %142 = vmatprep.subr.mxu0 0.0
    %143 = vmatpush1.msra.mxu0 %v90
    %144 = vmatprep.subr.mxu0 0.0
    %145 = vmatpush1.msra.mxu0 %v91
    %146 = vmatprep.subr.mxu0 0.0
    %147 = vmatpush1.msra.mxu0 %v92
    %148 = vmatprep.subr.mxu0 0.0
    %149 = vmatpush1.msra.mxu0 %v93
    %150 = vmatprep.subr.mxu0 0.0
    %151 = vmatpush1.msra.mxu0 %v94
    %152 = vmatprep.subr.mxu0 0.0
    %153 = vmatpush1.msra.mxu0 %v95
    %154 = vmatprep.subr.mxu0 0.0
    %155 = vmatpush1.msra.mxu0 %v96
    %156 = vmatprep.subr.mxu0 0.0
    %157 = vmatpush1.msra.mxu0 %v97
    %158 = vmatprep.subr.mxu0 0.0
    %159 = vmatpush1.msra.mxu0 %v98
    %160 = vmatprep.subr.mxu0 0.0
    %161 = vmatpush1.msra.mxu0 %v99
    %162 = vmatprep.subr.mxu0 0.0
    %163 = vmatpush1.msra.mxu0 %v100
    %164 = vmatprep.subr.mxu0 0.0
    %165 = vmatpush1.msra.mxu0 %v101
    %166 = vmatprep.subr.mxu0 0.0
    %167 = vmatpush1.msra.mxu0 %v102
    %168 = vmatprep.subr.mxu0 0.0
    %169 = vmatpush1.msra.mxu0 %v103
    %170 = vmatprep.subr.mxu0 0.0
    %171 = vmatpush1.msra.mxu0 %v104
    %172 = vmatprep.subr.mxu0 0.0
    %173 = vmatpush1.msra.mxu0 %v105
    %174 = vmatprep.subr.mxu0 0.0
    %175 = vmatpush1.msra.mxu0 %v106
    %176 = vmatprep.subr.mxu0 0.0
    %177 = vmatpush1.msra.mxu0 %v107
    %178 = vmatprep.subr.mxu0 0.0
    %179 = vmatpush1.msra.mxu0 %v108
    %180 = vmatprep.mubr.f32.mxu0 %v76
    %181 = vmatmul.mubr.f32.gmra.mrb[0].mxu0 %v75
    %v182 = vpop.f32.mrb[0].mxu0
    %v183 = vadd.f32 %v114, %v182
    %v184 = vpop.f32.mrb[0].mxu0
    %185 = vdwg.mxu0
    %v186 = vmax.f32 %v183, 0.0
    %v187 = vld [vmem:[#allocation5] sm:$0xff]
    %vm188 = vcmp.ge.u32.totalorder %v187, 2147483648
    %v189 = vmul.f32 %v186, 2.0
    %v190 = vsel %vm188, %v189, 0.0
    %v191 = vld [vmem:[#allocation8] sm:$0xff]
    %v192 = vld [vmem:[#allocation8 + $0x8] sm:$0xff]
    %v193 = vld [vmem:[#allocation8 + $0x10] sm:$0xff]
    %v194 = vld [vmem:[#allocation8 + $0x18] sm:$0xff]
    %v195 = vld [vmem:[#allocation8 + $0x20] sm:$0xff]
    %v196 = vld [vmem:[#allocation8 + $0x28] sm:$0xff]
    %v197 = vld [vmem:[#allocation8 + $0x30] sm:$0xff]
    %v198 = vld [vmem:[#allocation8 + $0x38] sm:$0xff]
    %v199 = vld [vmem:[#allocation8 + $0x40] sm:$0xff]
    %v200 = vld [vmem:[#allocation8 + $0x48] sm:$0xff]
    %v201 = vld [vmem:[#allocation8 + $0x50] sm:$0xff]
    %v202 = vld [vmem:[#allocation8 + $0x58] sm:$0xff]
    %v203 = vld [vmem:[#allocation8 + $0x60] sm:$0xff]
    %v204 = vld [vmem:[#allocation8 + $0x68] sm:$0xff]
    %v205 = vld [vmem:[#allocation8 + $0x70] sm:$0xff]
    %v206 = vld [vmem:[#allocation8 + $0x78] sm:$0xff]
    %v207 = vld [vmem:[%s5] sm:$0x1]
    %v209 = vlaneseq
    %v210 = vshrl.u32 %v209, 7
    %v211 = vsub.s32 0, %v210
    %v212 = vrot.slane %v207, %v211
    %214 = vmatprep.subr.mxu0 0.0
    %215 = vmatpush1.msra.mxu0 %v191
    %216 = vmatprep.subr.mxu0 0.0
    %217 = vmatpush1.msra.mxu0 %v192
    %218 = vmatprep.subr.mxu0 0.0
    %219 = vmatpush1.msra.mxu0 %v193
    %220 = vmatprep.subr.mxu0 0.0
    %221 = vmatpush1.msra.mxu0 %v194
    %222 = vmatprep.subr.mxu0 0.0
    %223 = vmatpush1.msra.mxu0 %v195
    %224 = vmatprep.subr.mxu0 0.0
    %225 = vmatpush1.msra.mxu0 %v196
    %226 = vmatprep.subr.mxu0 0.0
    %227 = vmatpush1.msra.mxu0 %v197
    %228 = vmatprep.subr.mxu0 0.0
    %229 = vmatpush1.msra.mxu0 %v198
    %230 = vmatprep.subr.mxu0 0.0
    %231 = vmatpush1.msra.mxu0 %v199
    %232 = vmatprep.subr.mxu0 0.0
    %233 = vmatpush1.msra.mxu0 %v200
    %234 = vmatprep.subr.mxu0 0.0
    %235 = vmatpush1.msra.mxu0 %v201
    %236 = vmatprep.subr.mxu0 0.0
    %237 = vmatpush1.msra.mxu0 %v202
    %238 = vmatprep.subr.mxu0 0.0
    %239 = vmatpush1.msra.mxu0 %v203
    %240 = vmatprep.subr.mxu0 0.0
    %241 = vmatpush1.msra.mxu0 %v204
    %242 = vmatprep.subr.mxu0 0.0
    %243 = vmatpush1.msra.mxu0 %v205
    %244 = vmatprep.subr.mxu0 0.0
    %245 = vmatpush1.msra.mxu0 %v206
    %246 = vmatprep.subr.mxu0 0.0
    %247 = vmatpush1.msra.mxu0 0.0
    %248 = vmatprep.subr.mxu0 0.0
    %249 = vmatpush1.msra.mxu0 0.0
    %250 = vmatprep.subr.mxu0 0.0
    %251 = vmatpush1.msra.mxu0 0.0
    %252 = vmatprep.subr.mxu0 0.0
    %253 = vmatpush1.msra.mxu0 0.0
    %254 = vmatprep.subr.mxu0 0.0
    %255 = vmatpush1.msra.mxu0 0.0
    %256 = vmatprep.subr.mxu0 0.0
    %257 = vmatpush1.msra.mxu0 0.0
    %258 = vmatprep.subr.mxu0 0.0
    %259 = vmatpush1.msra.mxu0 0.0
    %260 = vmatprep.subr.mxu0 0.0
    %261 = vmatpush1.msra.mxu0 0.0
    %262 = vmatprep.subr.mxu0 0.0
    %263 = vmatpush1.msra.mxu0 0.0
    %264 = vmatprep.subr.mxu0 0.0
    %265 = vmatpush1.msra.mxu0 0.0
    %266 = vmatprep.subr.mxu0 0.0
    %267 = vmatpush1.msra.mxu0 0.0
    %268 = vmatprep.subr.mxu0 0.0
    %269 = vmatpush1.msra.mxu0 0.0
    %270 = vmatprep.subr.mxu0 0.0
    %271 = vmatpush1.msra.mxu0 0.0
    %272 = vmatprep.subr.mxu0 0.0
    %273 = vmatpush1.msra.mxu0 0.0
    %274 = vmatprep.subr.mxu0 0.0
    %275 = vmatpush1.msra.mxu0 0.0
    %276 = vmatprep.subr.mxu0 0.0
    %277 = vmatpush1.msra.mxu0 0.0
    %278 = vmatprep.mubr.f32.mxu0 0.0
    %279 = vmatmul.mubr.f32.gmra.mrb[0].mxu0 %v190
    %v280 = vpop.f32.mrb[0].mxu0
    %v281 = vadd.f32 %v212, %v280
    %v282 = vpop.f32.mrb[0].mxu0
    %283 = vdwg.mxu0
    %284 = vst [vmem:[#allocation10] sm:$0xff] %v281
    // Predicated region
    $region42: #{tpu_custom_call.1} parent=1 // pred_check
      _
    $region43: #{tpu_custom_call.1} parent=1 // pred_check_branch
      %286 = sbr.rel (0) target = $region45
    $region44: #{tpu_custom_call.1} parent=1 // pred_region
      %s288 = ssub.s32 128, 128
      %289 = vsyncadd [#allocation4], %s288
      %s291 = sshll.u32 [#allocation10], 4
      %s292 = int_to_ptr.vmem [resolvable:$true] %s291
      %294 = dma.vmem_to_hbm [thread:$0]  %s292, 128, %s6, [#allocation4]
    $region45: #{tpu_custom_call.1} parent=1 // pred_fallthru
      _
    // Predicated region
    $region46: #{tpu_custom_call.1} parent=1 // pred_check
      _
    $region47: #{tpu_custom_call.1} parent=1 // pred_check_branch
      %296 = sbr.rel (0) target = $region49
    $region48: #{tpu_custom_call.1} parent=1 // pred_region
      %297 = dma.done [#allocation4], 128
    $region49: #{tpu_custom_call.1} parent=1 // pred_fallthru
      _
    %298 = vsyncpa [#allocation3], 1
    %299 = vsyncpa [#allocation6], 1
    %300 = vsyncpa [#allocation9], 1
    %301 = vsyncpa [#allocation4], 1

</llo_original>
